<compile_context>
chip_gen: v5e
topology: v5e:2x2
jax: 0.10.0
libtpu: 0.0.40
codegen_flags: <defaults>
</compile_context>

<pallas_src>
import math

import jax
import jax.numpy as jnp
from jax.experimental import pallas as pl
from jax.experimental.pallas import tpu as pltpu

_LANE = 128


def _make_weighted_avg_kernel(n_inputs):
    """Kernel: o = sum_i w[i] * x_i over the current (tm, C) tile."""

    def kernel(w_ref, *refs):
        # refs = (x_0, ..., x_{n-1}, o)
        o_ref = refs[-1]
        in_refs = refs[:-1]
        # Accumulate in f32; weights are scalars read from SMEM (scalar path),
        # so each term is one VPU multiply-accumulate over the tile.
        acc = in_refs[0][...].astype(jnp.float32) * w_ref[0]
        for i in range(1, n_inputs):
            acc = acc + in_refs[i][...].astype(jnp.float32) * w_ref[i]
        o_ref[...] = acc.astype(o_ref.dtype)

    return kernel


def _pick_tm(n_rows, tm_cap):
    """Row-tile: multiple of 8 within the VMEM budget, >=2 grid steps if possible."""
    if n_rows <= 8:
        return n_rows  # tiny input: full extent (legal block dim)
    tm = max(8, min((n_rows // 8) * 8, tm_cap))
    # Guarantee at least two grid steps when there's enough work so the grid
    # can be sharded across both TensorCores on v7x (and pipelining kicks in).
    while (n_rows + tm - 1) // tm < 2 and tm > 8:
        tm = max(8, ((tm // 2) // 8) * 8)
    return tm


def linear_weighted_avg(inputs, weights, *, lane_width=1024,
                        tile_budget_bytes=24 << 20):
    """Pallas forward of LinearWeightedAvg.

    inputs:  list of N arrays, all the same shape / dtype.
    weights: length-N array (or list) of scalar weights.
    """
    n = len(inputs)
    assert n >= 1
    orig_shape = inputs[0].shape
    dtype = inputs[0].dtype
    for x in inputs:
        assert x.shape == orig_shape and x.dtype == dtype

    total = math.prod(orig_shape) if orig_shape else 1

    # Lane-dense slab: wide last dim, multiple of 128.
    if total <= lane_width:
        C = ((total + _LANE - 1) // _LANE) * _LANE
    else:
        C = lane_width
    padded_total = ((total + C - 1) // C) * C
    R = padded_total // C

    flat = [x.reshape(-1) for x in inputs]
    if padded_total != total:
        pad = padded_total - total
        flat = [jnp.pad(x, (0, pad)) for x in flat]
    xs2 = [x.reshape(R, C) for x in flat]

    # VMEM-budget-aware row tile: double-buffered (n inputs + 1 output) streams.
    itemsize = jnp.dtype(dtype).itemsize
    streams = n + 1
    tm_cap = tile_budget_bytes // (2 * streams * C * itemsize)
    tm_cap = max(8, (tm_cap // 8) * 8)
    tm = _pick_tm(R, tm_cap)

    grid = (pl.cdiv(R, tm),)
    tile_spec = pl.BlockSpec((tm, C), lambda i: (i, 0))
    w = jnp.asarray(weights, jnp.float32).reshape(n)

    # Explicit scoped-VMEM limit with headroom; safe on all of v5e/v6e/v7x.
    buffer_bytes = 2 * streams * tm * C * itemsize
    vmem_limit = int(min(32 << 20, max(16 << 20, buffer_bytes + (4 << 20))))

    out = pl.pallas_call(
        _make_weighted_avg_kernel(n),
        out_shape=jax.ShapeDtypeStruct((R, C), dtype),
        grid=grid,
        in_specs=[pl.BlockSpec(memory_space=pltpu.MemorySpace.SMEM)]  # weights
        + [tile_spec] * n,                                            # embeddings
        out_specs=tile_spec,
        compiler_params=pltpu.CompilerParams(
            dimension_semantics=("parallel",),
            vmem_limit_bytes=vmem_limit,
        ),
    )(w, *xs2)

    out_flat = out.reshape(-1)
    if padded_total != total:
        out_flat = out_flat[:total]
    return out_flat.reshape(orig_shape)


def linear_weighted_avg_reference(inputs, weights):
    """Pure-JAX reference mirroring the PyTorch forward."""
    w = jnp.asarray(weights, jnp.float32)
    res = jnp.zeros_like(inputs[0], dtype=jnp.float32)
    for i, emb in enumerate(inputs):
        res = res + emb.astype(jnp.float32) * w[i]
    return res.astype(inputs[0].dtype)


if __name__ == "__main__":
    key = jax.random.PRNGKey(0)
    n_inputs = 3
    B, D = 24, 384  # small, deterministic example embeddings

    keys = jax.random.split(key, n_inputs + 1)
    inputs = [
        jax.random.normal(keys[i], (B, D), dtype=jnp.float32)
        for i in range(n_inputs)
    ]

    # Module init: every weight = 1 / n_inputs.
    # total = 9216 -> slab (9, 1024), tm = 8, grid = (2,): exercises the
    # multi-step pipelined grid with a masked partial last block.
    w_init = jnp.full((n_inputs,), 1.0 / n_inputs, dtype=jnp.float32)
    out = linear_weighted_avg(inputs, w_init)
    jax.block_until_ready(out)
    ref = linear_weighted_avg_reference(inputs, w_init)
    assert out.shape == (B, D)
    assert jnp.allclose(out, ref, rtol=1e-6, atol=1e-6), "mismatch (init weights)"

    # Distinct (post-training-like) weights + ragged total to exercise the
    # pad / slice path (total = 24*100 = 2400 -> padded slab (3, 1024)).
    w_rand = jax.random.uniform(keys[-1], (n_inputs,), dtype=jnp.float32)
    inputs_ragged = [x[:, :100] for x in inputs]
    out2 = linear_weighted_avg(inputs_ragged, w_rand)
    jax.block_until_ready(out2)
    ref2 = linear_weighted_avg_reference(inputs_ragged, w_rand)
    assert out2.shape == (B, 100)
    assert jnp.allclose(out2, ref2, rtol=1e-6, atol=1e-6), "mismatch (ragged/random)"

    print("KERNEL_OK")
</pallas_src>

<mosaic_0001>
module attributes {stable_mosaic.version = 11 : i64} {
  func.func @kernel(%arg0: i32, %arg1: memref<3xf32, #tpu.memory_space<smem>>, %arg2: memref<8x1024xf32, #tpu.memory_space<vmem>>, %arg3: memref<8x1024xf32, #tpu.memory_space<vmem>>, %arg4: memref<8x1024xf32, #tpu.memory_space<vmem>>, %arg5: memref<8x1024xf32, #tpu.memory_space<vmem>>) attributes {dimension_semantics = [#tpu.dimension_semantics<parallel>], iteration_bounds = array<i64: 2>, scalar_prefetch = 0 : i64, scratch_operands = 0 : i64, tpu.core_type = #tpu.core_type<tc>, window_params = [{transform_indices = @transform_0, window_bounds = array<i64: 3>}, {transform_indices = @transform_1, window_bounds = array<i64: 8, 1024>}, {transform_indices = @transform_2, window_bounds = array<i64: 8, 1024>}, {transform_indices = @transform_3, window_bounds = array<i64: 8, 1024>}, {transform_indices = @transform_4, window_bounds = array<i64: 8, 1024>}]} {
    %c0 = arith.constant 0 : index
    %c0_0 = arith.constant 0 : index
    %0 = vector.load %arg2[%c0, %c0_0] : memref<8x1024xf32, #tpu.memory_space<vmem>>, vector<8x1024xf32>
    %c0_1 = arith.constant 0 : index
    %1 = memref.load %arg1[%c0_1] : memref<3xf32, #tpu.memory_space<smem>>
    %2 = vector.broadcast %1 : f32 to vector<8x1024xf32>
    %3 = arith.mulf %0, %2 : vector<8x1024xf32>
    %c0_2 = arith.constant 0 : index
    %c0_3 = arith.constant 0 : index
    %4 = vector.load %arg3[%c0_2, %c0_3] : memref<8x1024xf32, #tpu.memory_space<vmem>>, vector<8x1024xf32>
    %c1 = arith.constant 1 : index
    %5 = memref.load %arg1[%c1] : memref<3xf32, #tpu.memory_space<smem>>
    %6 = vector.broadcast %5 : f32 to vector<8x1024xf32>
    %7 = arith.mulf %4, %6 : vector<8x1024xf32>
    %8 = arith.addf %3, %7 : vector<8x1024xf32>
    %c0_4 = arith.constant 0 : index
    %c0_5 = arith.constant 0 : index
    %9 = vector.load %arg4[%c0_4, %c0_5] : memref<8x1024xf32, #tpu.memory_space<vmem>>, vector<8x1024xf32>
    %c2 = arith.constant 2 : index
    %10 = memref.load %arg1[%c2] : memref<3xf32, #tpu.memory_space<smem>>
    %11 = vector.broadcast %10 : f32 to vector<8x1024xf32>
    %12 = arith.mulf %9, %11 : vector<8x1024xf32>
    %13 = arith.addf %8, %12 : vector<8x1024xf32>
    %c0_6 = arith.constant 0 : index
    %c0_7 = arith.constant 0 : index
    %14 = vector.load %arg5[%c0_6, %c0_7] : memref<8x1024xf32, #tpu.memory_space<vmem>>, vector<8x1024xf32>
    tpu.vector_store %arg5[%c0_6, %c0_7], %13 {strides = array<i32>} : memref<8x1024xf32, #tpu.memory_space<vmem>>, vector<8x1024xf32>,
    return
  }
  func.func @transform_0(%arg0: i32) -> i32 {
    %c0_i32 = arith.constant 0 : i32
    %c0_i32_0 = arith.constant 0 : i32
    return %c0_i32 : i32
  }
  func.func @transform_1(%arg0: i32) -> (i32, i32) {
    %c0_i32 = arith.constant 0 : i32
    %c0_i32_0 = arith.constant 0 : i32
    return %arg0, %c0_i32 : i32, i32
  }
  func.func @transform_2(%arg0: i32) -> (i32, i32) {
    %c0_i32 = arith.constant 0 : i32
    %c0_i32_0 = arith.constant 0 : i32
    return %arg0, %c0_i32 : i32, i32
  }
  func.func @transform_3(%arg0: i32) -> (i32, i32) {
    %c0_i32 = arith.constant 0 : i32
    %c0_i32_0 = arith.constant 0 : i32
    return %arg0, %c0_i32 : i32, i32
  }
  func.func @transform_4(%arg0: i32) -> (i32, i32) {
    %c0_i32 = arith.constant 0 : i32
    %c0_i32_0 = arith.constant 0 : i32
    return %arg0, %c0_i32 : i32, i32
  }
}

</mosaic_0001>

<llo_original>
// kernel: tpu_custom_call.1
$region0: #{tpu_custom_call.1}
  #allocation0 [shape = 'u32[]', space=smem, size = 0x4, offset = 0x4, fixed_abs, tag = 'smem constant byte address 0x4 - core index']
  #allocation1 [shape = 'u32[72,128]{1,0:T(1,128)}', space=vmem, size = 0x9000, scoped, tag = 'internal scratch']
  %s0 = inlined_call_operand.hbm [shape: f32[3], index: 0, kind: input, shape index: {}]
  %s1 = inlined_call_operand.hbm [shape: f32[9,1024], index: 1, kind: input, shape index: {}]
  %s2 = inlined_call_operand.hbm [shape: f32[9,1024], index: 2, kind: input, shape index: {}]
  %s3 = inlined_call_operand.hbm [shape: f32[9,1024], index: 3, kind: input, shape index: {}]
  %s4 = inlined_call_operand.hbm [shape: f32[9,1024], index: 4, kind: output, shape index: {}]
  %s5 = sld [smem:[#allocation0]]
  $region65: #{tpu_custom_call.1} parent=0
    _
  %s7 = ssub.s32 1, %s5
  %s8 = scalar_select 0, %s7, %s5
  $region1: #{tpu_custom_call.1} parent=0
    #allocation2 [shape = 'u8[512]{0}', space=smem, size = 0x200, scoped, tag = 'input window, operand 0, single buffered']
    #allocation3 [shape = 's32[2]{0}', space=sflag, size = 0x8, scoped, tag = 'scoped memory for tpu_custom_call.1']
    #allocation4 [shape = 's32[2]{0}', space=sflag, size = 0x8, scoped, tag = 'scoped memory for tpu_custom_call.1']
    #allocation5 [shape = 's32[2]{0}', space=sflag, size = 0x8, scoped, tag = 'scoped memory for tpu_custom_call.1']
    #allocation6 [shape = 'u8[65536]{0}', space=vmem, size = 0x10000, scoped, tag = 'input window, operand 1']
    #allocation7 [shape = 'u8[65536]{0}', space=vmem, size = 0x10000, scoped, tag = 'input window, operand 2']
    #allocation8 [shape = 's32[2]{0}', space=sflag, size = 0x8, scoped, tag = 'scoped memory for tpu_custom_call.1']
    #allocation9 [shape = 'u8[65536]{0}', space=vmem, size = 0x10000, scoped, tag = 'input window, operand 3']
    #allocation10 [shape = 'u8[65536]{0}', space=vmem, size = 0x10000, scoped, tag = 'output window, operand 0']
    %9 = vsyncpa [#allocation5], 0
    %10 = vsyncpa [#allocation3], 0
    %s11 = scalar_lea.sflag [#allocation3], 1
    %12 = vsyncpa %s11, 0
    %13 = vsyncpa [#allocation8], 0
    %s14 = scalar_lea.sflag [#allocation8], 1
    %15 = vsyncpa %s14, 0
    %16 = vsyncpa [#allocation4], 0
    %s17 = scalar_lea.sflag [#allocation4], 1
    %18 = vsyncpa %s17, 0
    loop: start=0, step=1, limit=4
    $region2: #{tpu_custom_call.1} parent=1 // loop_pre_header
      _
    $region3: #{tpu_custom_call.1} parent=1 // loop_header
      %s20 = sphi 0, %s24
      %p21 = scmp.ge.s32.totalorder %s20, 4
      %s28 = sphi 0, %s28
      %s30 = sphi 0, %s28
      %s31 = sphi 0, %s30
      %s45 = sphi 0, %s31
      %s51 = sphi 0, %s53
      %s54 = sphi 0, %s51
      %s55 = sphi 0, %s54
      %s71 = sphi 0, %s55
      %s77 = sphi 0, %s79
      %s80 = sphi 0, %s77
      %s81 = sphi 0, %s80
      %s97 = sphi 0, %s81
      %s103 = sphi 0, %s105
      %s106 = sphi 0, %s103
      %s107 = sphi 0, %s106
      %s123 = sphi 0, %s107
      %s129 = sphi 0, %s131
      %s132 = sphi 0, %s129
      %s133 = sphi 0, %s132
      %s149 = sphi 0, %s133
    $region4: #{tpu_custom_call.1} parent=1 // loop_header_branch
      %23 = sbr.rel (%p21) target = $region8
    $region5: #{tpu_custom_call.1} parent=1 // loop_body
      %s25 = ssub.s32 %s20, 1
      %s26 = ssub.s32 %s20, 2
      %s27 = sadd.s32 %s20, 1
      %s29 = sadd.s32 %s28, 1
      %p32 = scmp.eq.s32.totalorder %s20, 1
      %p33 = scmp.ne.s32.totalorder %s28, %s30
      %p34 = scmp.eq.s32.totalorder %s20, 0
      %p35 = por %p33, %p34
      %p36 = scmp.ne.s32.totalorder %s28, %s30
      %p37 = scmp.eq.s32.totalorder %s25, 1
      %p38 = por %p36, %p37
      %p39 = scmp.ne.s32.totalorder %s30, %s31
      %p40 = scmp.eq.s32.totalorder %s25, 0
      %p41 = por %p39, %p40
      %p42 = scmp.ne.s32.totalorder %s30, %s31
      %p43 = scmp.eq.s32.totalorder %s26, 1
      %p44 = por %p42, %p43
      %p46 = scmp.ne.s32.totalorder %s31, %s45
      %p47 = scmp.eq.s32.totalorder %s26, 0
      %p48 = por %p46, %p47
      %s49 = ssub.s32 %s20, %s27
      %p50 = scmp.eq.s32.totalorder %s49, 0
      %s52 = sadd.s32 %s51, 1
      %s53 = scalar_select %p50, %s51, %s52
      %p56 = pneg %p50
      %p57 = scmp.eq.s32.totalorder %s20, 1
      %p58 = por %p56, %p57
      %p59 = scmp.ne.s32.totalorder %s51, %s54
      %p60 = scmp.eq.s32.totalorder %s20, 0
      %p61 = por %p59, %p60
      %p62 = scmp.ne.s32.totalorder %s51, %s54
      %p63 = scmp.eq.s32.totalorder %s25, 1
      %p64 = por %p62, %p63
      %p65 = scmp.ne.s32.totalorder %s54, %s55
      %p66 = scmp.eq.s32.totalorder %s25, 0
      %p67 = por %p65, %p66
      %p68 = scmp.ne.s32.totalorder %s54, %s55
      %p69 = scmp.eq.s32.totalorder %s26, 1
      %p70 = por %p68, %p69
      %p72 = scmp.ne.s32.totalorder %s55, %s71
      %p73 = scmp.eq.s32.totalorder %s26, 0
      %p74 = por %p72, %p73
      %s75 = ssub.s32 %s20, %s27
      %p76 = scmp.eq.s32.totalorder %s75, 0
      %s78 = sadd.s32 %s77, 1
      %s79 = scalar_select %p76, %s77, %s78
      %p82 = pneg %p76
      %p83 = scmp.eq.s32.totalorder %s20, 1
      %p84 = por %p82, %p83
      %p85 = scmp.ne.s32.totalorder %s77, %s80
      %p86 = scmp.eq.s32.totalorder %s20, 0
      %p87 = por %p85, %p86
      %p88 = scmp.ne.s32.totalorder %s77, %s80
      %p89 = scmp.eq.s32.totalorder %s25, 1
      %p90 = por %p88, %p89
      %p91 = scmp.ne.s32.totalorder %s80, %s81
      %p92 = scmp.eq.s32.totalorder %s25, 0
      %p93 = por %p91, %p92
      %p94 = scmp.ne.s32.totalorder %s80, %s81
      %p95 = scmp.eq.s32.totalorder %s26, 1
      %p96 = por %p94, %p95
      %p98 = scmp.ne.s32.totalorder %s81, %s97
      %p99 = scmp.eq.s32.totalorder %s26, 0
      %p100 = por %p98, %p99
      %s101 = ssub.s32 %s20, %s27
      %p102 = scmp.eq.s32.totalorder %s101, 0
      %s104 = sadd.s32 %s103, 1
      %s105 = scalar_select %p102, %s103, %s104
      %p108 = pneg %p102
      %p109 = scmp.eq.s32.totalorder %s20, 1
      %p110 = por %p108, %p109
      %p111 = scmp.ne.s32.totalorder %s103, %s106
      %p112 = scmp.eq.s32.totalorder %s20, 0
      %p113 = por %p111, %p112
      %p114 = scmp.ne.s32.totalorder %s103, %s106
      %p115 = scmp.eq.s32.totalorder %s25, 1
      %p116 = por %p114, %p115
      %p117 = scmp.ne.s32.totalorder %s106, %s107
      %p118 = scmp.eq.s32.totalorder %s25, 0
      %p119 = por %p117, %p118
      %p120 = scmp.ne.s32.totalorder %s106, %s107
      %p121 = scmp.eq.s32.totalorder %s26, 1
      %p122 = por %p120, %p121
      %p124 = scmp.ne.s32.totalorder %s107, %s123
      %p125 = scmp.eq.s32.totalorder %s26, 0
      %p126 = por %p124, %p125
      %s127 = ssub.s32 %s20, %s27
      %p128 = scmp.eq.s32.totalorder %s127, 0
      %s130 = sadd.s32 %s129, 1
      %s131 = scalar_select %p128, %s129, %s130
      %p134 = pneg %p128
      %p135 = scmp.eq.s32.totalorder %s20, 1
      %p136 = por %p134, %p135
      %p137 = scmp.ne.s32.totalorder %s129, %s132
      %p138 = scmp.eq.s32.totalorder %s20, 0
      %p139 = por %p137, %p138
      %p140 = scmp.ne.s32.totalorder %s129, %s132
      %p141 = scmp.eq.s32.totalorder %s25, 1
      %p142 = por %p140, %p141
      %p143 = scmp.ne.s32.totalorder %s132, %s133
      %p144 = scmp.eq.s32.totalorder %s25, 0
      %p145 = por %p143, %p144
      %p146 = scmp.ne.s32.totalorder %s132, %s133
      %p147 = scmp.eq.s32.totalorder %s26, 1
      %p148 = por %p146, %p147
      %p150 = scmp.ne.s32.totalorder %s133, %s149
      %p151 = scmp.eq.s32.totalorder %s26, 0
      %p152 = por %p150, %p151
      %p153 = scmp.le.s32.totalorder 1, %s20
      %p154 = scmp.lt.s32.totalorder %s20, 3
      %p155 = pnand %p153, %p154
      %p156 = pneg %p155
      // Predicated region
      $region9: #{tpu_custom_call.1} parent=5 // pred_check
        _
      $region10: #{tpu_custom_call.1} parent=5 // pred_check_branch
        %158 = sbr.rel (%p155) target = $region12
      $region11: #{tpu_custom_call.1} parent=5 // pred_region
        %s159 = ssub.s32 %s20, 1
        // Predicated region
        $region13: #{tpu_custom_call.1} parent=11 // pred_check
          %p160 = pneg %p41
        $region14: #{tpu_custom_call.1} parent=11 // pred_check_branch
          %162 = sbr.rel (%p160) target = $region16
        $region15: #{tpu_custom_call.1} parent=11 // pred_region
          %164 = vsyncadd [#allocation5], 0
          %s166 = sshll.u32 %s0, 4
          %s167 = int_to_ptr.hbm [resolvable:$true] %s166
          %169 = dma.hbm_to_smem %s167, 16, [#allocation2], [#allocation5]
        $region16: #{tpu_custom_call.1} parent=11 // pred_fallthru
          _
      $region12: #{tpu_custom_call.1} parent=5 // pred_fallthru
        _
      %p170 = scmp.lt.s32.totalorder %s20, 2
      // Predicated region
      $region17: #{tpu_custom_call.1} parent=5 // pred_check
        %p171 = pneg %p170
      $region18: #{tpu_custom_call.1} parent=5 // pred_check_branch
        %173 = sbr.rel (%p171) target = $region20
      $region19: #{tpu_custom_call.1} parent=5 // pred_region
        // Predicated region
        $region21: #{tpu_custom_call.1} parent=19 // pred_check
          %p174 = pneg %p61
        $region22: #{tpu_custom_call.1} parent=19 // pred_check_branch
          %176 = sbr.rel (%p174) target = $region24
        $region23: #{tpu_custom_call.1} parent=19 // pred_region
          %s177 = sand.u32 %s51, 1
          %s178 = scalar_lea.sflag [#allocation3], %s177
          %s179 = sand.u32 %s51, 1
          %s180 = smul.addr %s179, 64
          %s181 = scalar_lea.vmem [#allocation6], %s180
          %183 = vsyncadd %s178, 0
          %s184 = smul.addr %s20, 8
          %s185 = smul.addr %s184, 8
          %s186 = scalar_lea.hbm %s1, %s185
          %s188 = sshll.u32 %s186, 4
          %s189 = int_to_ptr.hbm [resolvable:$true] %s188
          %s190 = sshll.u32 %s181, 4
          %s191 = int_to_ptr.vmem [resolvable:$true] %s190
          %193 = dma.hbm_to_vmem [thread:$0]  %s189, 1024, %s191, %s178
        $region24: #{tpu_custom_call.1} parent=19 // pred_fallthru
          _
        // Predicated region
        $region25: #{tpu_custom_call.1} parent=19 // pred_check
          %p194 = pneg %p87
        $region26: #{tpu_custom_call.1} parent=19 // pred_check_branch
          %196 = sbr.rel (%p194) target = $region28
        $region27: #{tpu_custom_call.1} parent=19 // pred_region
          %s197 = sand.u32 %s20, 1
          %s198 = scalar_lea.sflag [#allocation8], %s197
          %s199 = sand.u32 %s77, 1
          %s200 = smul.addr %s199, 64
          %s201 = scalar_lea.vmem [#allocation7], %s200
          %203 = vsyncadd %s198, 0
          %s204 = smul.addr %s20, 8
          %s205 = smul.addr %s204, 8
          %s206 = scalar_lea.hbm %s2, %s205
          %s208 = sshll.u32 %s206, 4
          %s209 = int_to_ptr.hbm [resolvable:$true] %s208
          %s210 = sshll.u32 %s201, 4
          %s211 = int_to_ptr.vmem [resolvable:$true] %s210
          %213 = dma.hbm_to_vmem [thread:$0]  %s209, 1024, %s211, %s198
        $region28: #{tpu_custom_call.1} parent=19 // pred_fallthru
          _
        // Predicated region
        $region29: #{tpu_custom_call.1} parent=19 // pred_check
          %p214 = pneg %p113
        $region30: #{tpu_custom_call.1} parent=19 // pred_check_branch
          %216 = sbr.rel (%p214) target = $region32
        $region31: #{tpu_custom_call.1} parent=19 // pred_region
          %s217 = sand.u32 %s20, 1
          %s218 = scalar_lea.sflag [#allocation8], %s217
          %s219 = sand.u32 %s103, 1
          %s220 = smul.addr %s219, 64
          %s221 = scalar_lea.vmem [#allocation9], %s220
          %223 = vsyncadd %s218, 0
          %s224 = smul.addr %s20, 8
          %s225 = smul.addr %s224, 8
          %s226 = scalar_lea.hbm %s3, %s225
          %s228 = sshll.u32 %s226, 4
          %s229 = int_to_ptr.hbm [resolvable:$true] %s228
          %s230 = sshll.u32 %s221, 4
          %s231 = int_to_ptr.vmem [resolvable:$true] %s230
          %233 = dma.hbm_to_vmem [thread:$0]  %s229, 1024, %s231, %s218
        $region32: #{tpu_custom_call.1} parent=19 // pred_fallthru
          _
      $region20: #{tpu_custom_call.1} parent=5 // pred_fallthru
        _
      %p234 = scmp.le.s32.totalorder 1, %s20
      %p235 = scmp.lt.s32.totalorder %s20, 3
      %p236 = pnand %p234, %p235
      %p237 = pneg %p236
      // Predicated region
      $region33: #{tpu_custom_call.1} parent=5 // pred_check
        _
      $region34: #{tpu_custom_call.1} parent=5 // pred_check_branch
        %239 = sbr.rel (%p236) target = $region36
      $region35: #{tpu_custom_call.1} parent=5 // pred_region
        %s240 = ssub.s32 %s20, 1
        // Predicated region
        $region37: #{tpu_custom_call.1} parent=35 // pred_check
          %p241 = pneg %p41
        $region38: #{tpu_custom_call.1} parent=35 // pred_check_branch
          %243 = sbr.rel (%p241) target = $region40
        $region39: #{tpu_custom_call.1} parent=35 // pred_region
          %245 = dma.done [#allocation5], 16
        $region40: #{tpu_custom_call.1} parent=35 // pred_fallthru
          _
        %s246 = sand.u32 %s54, 1
        %s247 = scalar_lea.sflag [#allocation3], %s246
        %s248 = sand.u32 %s54, 1
        %s249 = smul.addr %s248, 64
        %s250 = scalar_lea.vmem [#allocation6], %s249
        // Predicated region
        $region41: #{tpu_custom_call.1} parent=35 // pred_check
          %p251 = pneg %p67
        $region42: #{tpu_custom_call.1} parent=35 // pred_check_branch
          %253 = sbr.rel (%p251) target = $region44
        $region43: #{tpu_custom_call.1} parent=35 // pred_region
          %255 = dma.done %s247, 1024
        $region44: #{tpu_custom_call.1} parent=35 // pred_fallthru
          _
        %s256 = sand.u32 %s25, 1
        %s257 = scalar_lea.sflag [#allocation8], %s256
        %s258 = sand.u32 %s80, 1
        %s259 = smul.addr %s258, 64
        %s260 = scalar_lea.vmem [#allocation7], %s259
        // Predicated region
        $region45: #{tpu_custom_call.1} parent=35 // pred_check
          %p261 = pneg %p93
        $region46: #{tpu_custom_call.1} parent=35 // pred_check_branch
          %263 = sbr.rel (%p261) target = $region48
        $region47: #{tpu_custom_call.1} parent=35 // pred_region
          %265 = dma.done %s257, 1024
        $region48: #{tpu_custom_call.1} parent=35 // pred_fallthru
          _
        %s266 = sand.u32 %s25, 1
        %s267 = scalar_lea.sflag [#allocation8], %s266
        %s268 = sand.u32 %s106, 1
        %s269 = smul.addr %s268, 64
        %s270 = scalar_lea.vmem [#allocation9], %s269
        // Predicated region
        $region49: #{tpu_custom_call.1} parent=35 // pred_check
          %p271 = pneg %p119
        $region50: #{tpu_custom_call.1} parent=35 // pred_check_branch
          %273 = sbr.rel (%p271) target = $region52
        $region51: #{tpu_custom_call.1} parent=35 // pred_region
          %275 = dma.done %s267, 1024
        $region52: #{tpu_custom_call.1} parent=35 // pred_fallthru
          _
        %276 = sfence
        %p277 = pneg %p41
        %p278 = pneg %p38
        %s279 = sand.u32 %s54, 1
        %s280 = scalar_lea.sflag [#allocation3], %s279
        %s281 = sand.u32 %s54, 1
        %s282 = smul.addr %s281, 64
        %s283 = scalar_lea.vmem [#allocation6], %s282
        %p284 = pneg %p67
        %p285 = pneg %p64
        %s286 = sand.u32 %s25, 1
        %s287 = scalar_lea.sflag [#allocation8], %s286
        %s288 = sand.u32 %s80, 1
        %s289 = smul.addr %s288, 64
        %s290 = scalar_lea.vmem [#allocation7], %s289
        %p291 = pneg %p93
        %p292 = pneg %p90
        %s293 = sand.u32 %s25, 1
        %s294 = scalar_lea.sflag [#allocation8], %s293
        %s295 = sand.u32 %s106, 1
        %s296 = smul.addr %s295, 64
        %s297 = scalar_lea.vmem [#allocation9], %s296
        %p298 = pneg %p119
        %p299 = pneg %p116
        %p300 = pneg %p145
        %p301 = pneg %p142
        %s302 = sand.u32 %s132, 1
        %s303 = scalar_lea.sflag [#allocation4], %s302
        %s304 = sand.u32 %s132, 1
        %s305 = smul.addr %s304, 64
        %s306 = scalar_lea.vmem [#allocation10], %s305
        %v307 = vld [vmem:[%s250] sm:$0xff]
        %v308 = vld [vmem:[%s250 + $0x8] sm:$0xff]
        %v309 = vld [vmem:[%s250 + $0x10] sm:$0xff]
        %v310 = vld [vmem:[%s250 + $0x18] sm:$0xff]
        %v311 = vld [vmem:[%s250 + $0x20] sm:$0xff]
        %v312 = vld [vmem:[%s250 + $0x28] sm:$0xff]
        %v313 = vld [vmem:[%s250 + $0x30] sm:$0xff]
        %v314 = vld [vmem:[%s250 + $0x38] sm:$0xff]
        %s315 = sld [smem:[#allocation2]]
        %v316 = vstv %s315
        %v317 = vmul.f32 %v307, %v316
        %v318 = vmul.f32 %v308, %v316
        %v319 = vmul.f32 %v309, %v316
        %v320 = vmul.f32 %v310, %v316
        %v321 = vmul.f32 %v311, %v316
        %v322 = vmul.f32 %v312, %v316
        %v323 = vmul.f32 %v313, %v316
        %v324 = vmul.f32 %v314, %v316
        %v325 = vld [vmem:[%s260] sm:$0xff]
        %v326 = vld [vmem:[%s260 + $0x8] sm:$0xff]
        %v327 = vld [vmem:[%s260 + $0x10] sm:$0xff]
        %v328 = vld [vmem:[%s260 + $0x18] sm:$0xff]
        %v329 = vld [vmem:[%s260 + $0x20] sm:$0xff]
        %v330 = vld [vmem:[%s260 + $0x28] sm:$0xff]
        %v331 = vld [vmem:[%s260 + $0x30] sm:$0xff]
        %v332 = vld [vmem:[%s260 + $0x38] sm:$0xff]
        %s333 = sld [smem:[#allocation2 + $0x1]]
        %v334 = vstv %s333
        %v335 = vmul.f32 %v325, %v334
        %v336 = vmul.f32 %v326, %v334
        %v337 = vmul.f32 %v327, %v334
        %v338 = vmul.f32 %v328, %v334
        %v339 = vmul.f32 %v329, %v334
        %v340 = vmul.f32 %v330, %v334
        %v341 = vmul.f32 %v331, %v334
        %v342 = vmul.f32 %v332, %v334
        %v343 = vadd.f32 %v317, %v335
        %v344 = vadd.f32 %v318, %v336
        %v345 = vadd.f32 %v319, %v337
        %v346 = vadd.f32 %v320, %v338
        %v347 = vadd.f32 %v321, %v339
        %v348 = vadd.f32 %v322, %v340
        %v349 = vadd.f32 %v323, %v341
        %v350 = vadd.f32 %v324, %v342
        %v351 = vld [vmem:[%s270] sm:$0xff]
        %v352 = vld [vmem:[%s270 + $0x8] sm:$0xff]
        %v353 = vld [vmem:[%s270 + $0x10] sm:$0xff]
        %v354 = vld [vmem:[%s270 + $0x18] sm:$0xff]
        %v355 = vld [vmem:[%s270 + $0x20] sm:$0xff]
        %v356 = vld [vmem:[%s270 + $0x28] sm:$0xff]
        %v357 = vld [vmem:[%s270 + $0x30] sm:$0xff]
        %v358 = vld [vmem:[%s270 + $0x38] sm:$0xff]
        %s359 = sld [smem:[#allocation2 + $0x2]]
        %v360 = vstv %s359
        %v361 = vmul.f32 %v351, %v360
        %v362 = vmul.f32 %v352, %v360
        %v363 = vmul.f32 %v353, %v360
        %v364 = vmul.f32 %v354, %v360
        %v365 = vmul.f32 %v355, %v360
        %v366 = vmul.f32 %v356, %v360
        %v367 = vmul.f32 %v357, %v360
        %v368 = vmul.f32 %v358, %v360
        %v369 = vadd.f32 %v343, %v361
        %v370 = vadd.f32 %v344, %v362
        %v371 = vadd.f32 %v345, %v363
        %v372 = vadd.f32 %v346, %v364
        %v373 = vadd.f32 %v347, %v365
        %v374 = vadd.f32 %v348, %v366
        %v375 = vadd.f32 %v349, %v367
        %v376 = vadd.f32 %v350, %v368
        %377 = vst [vmem:[%s306] sm:$0xff] %v369
        %378 = vst [vmem:[%s306 + $0x8] sm:$0xff] %v370
        %379 = vst [vmem:[%s306 + $0x10] sm:$0xff] %v371
        %380 = vst [vmem:[%s306 + $0x18] sm:$0xff] %v372
        %381 = vst [vmem:[%s306 + $0x20] sm:$0xff] %v373
        %382 = vst [vmem:[%s306 + $0x28] sm:$0xff] %v374
        %383 = vst [vmem:[%s306 + $0x30] sm:$0xff] %v375
        %384 = vst [vmem:[%s306 + $0x38] sm:$0xff] %v376
        %s385 = sand.u32 %s132, 1
        %s386 = scalar_lea.sflag [#allocation4], %s385
        %s387 = sand.u32 %s132, 1
        %s388 = smul.addr %s387, 64
        %s389 = scalar_lea.vmem [#allocation10], %s388
        // Predicated region
        $region53: #{tpu_custom_call.1} parent=35 // pred_check
          %p390 = pneg %p142
        $region54: #{tpu_custom_call.1} parent=35 // pred_check_branch
          %392 = sbr.rel (%p390) target = $region56
        $region55: #{tpu_custom_call.1} parent=35 // pred_region
          %394 = vsyncadd %s386, 0
          %s395 = smul.addr %s25, 8
          %s396 = smul.addr %s395, 8
          %s397 = scalar_lea.hbm %s4, %s396
          %s399 = sshll.u32 %s389, 4
          %s400 = int_to_ptr.vmem [resolvable:$true] %s399
          %s401 = sshll.u32 %s397, 4
          %s402 = int_to_ptr.hbm [resolvable:$true] %s401
          %404 = dma.vmem_to_hbm [thread:$0]  %s400, 1024, %s402, %s386
        $region56: #{tpu_custom_call.1} parent=35 // pred_fallthru
          _
      $region36: #{tpu_custom_call.1} parent=5 // pred_fallthru
        _
      %p405 = scmp.le.s32.totalorder 2, %s20
      // Predicated region
      $region57: #{tpu_custom_call.1} parent=5 // pred_check
        %p406 = pneg %p405
      $region58: #{tpu_custom_call.1} parent=5 // pred_check_branch
        %408 = sbr.rel (%p406) target = $region60
      $region59: #{tpu_custom_call.1} parent=5 // pred_region
        %s409 = ssub.s32 %s20, 2
        // Predicated region
        $region61: #{tpu_custom_call.1} parent=59 // pred_check
          %p410 = pneg %p148
        $region62: #{tpu_custom_call.1} parent=59 // pred_check_branch
          %412 = sbr.rel (%p410) target = $region64
        $region63: #{tpu_custom_call.1} parent=59 // pred_region
          %s413 = sand.u32 %s133, 1
          %s414 = scalar_lea.sflag [#allocation4], %s413
          %s415 = sand.u32 %s133, 1
          %s416 = smul.addr %s415, 64
          %s417 = scalar_lea.vmem [#allocation10], %s416
          %419 = dma.done %s414, 1024
        $region64: #{tpu_custom_call.1} parent=59 // pred_fallthru
          _
      $region60: #{tpu_custom_call.1} parent=5 // pred_fallthru
        _
    $region6: #{tpu_custom_call.1} parent=1 // loop_footer
      %s24 = sadd.s32 1, %s20
    $region7: #{tpu_custom_call.1} parent=1 // loop_footer_branch
      %19 = sbr.rel target = $region3
    $region8: #{tpu_custom_call.1} parent=1 // loop_exit
      _
    %420 = vsyncpa [#allocation3], 1
    %s421 = scalar_lea.sflag [#allocation3], 1
    %422 = vsyncpa %s421, 1
    %423 = vsyncpa [#allocation8], 1
    %s424 = scalar_lea.sflag [#allocation8], 1
    %425 = vsyncpa %s424, 1
    %426 = vsyncpa [#allocation4], 1
    %s427 = scalar_lea.sflag [#allocation4], 1
    %428 = vsyncpa %s427, 1
    %429 = vsyncpa [#allocation5], 1
    %s430 = scalar_lea.sflag [#allocation5], 1
    %431 = vsyncpa %s430, 1

</llo_original>
